<compile_context>
chip_gen: v7x
topology: tpu7x:2x2x1
jax: 0.10.0
libtpu: 0.0.40
codegen_flags: <defaults>
</compile_context>

<pallas_src>
import functools

import jax
import jax.numpy as jnp
import numpy as np
from jax.experimental import pallas as pl
from jax.experimental.pallas import tpu as pltpu


# ---------------------------------------------------------------------------
# Small helpers
# ---------------------------------------------------------------------------
def _round_up(x, m):
    return ((x + m - 1) // m) * m


def _pad2d(a, rows, cols):
    return jnp.pad(a, ((0, rows - a.shape[0]), (0, cols - a.shape[1])))


def _choose_node_tiling(n):
    """Pick (tm, tk, n_pad): row tile, reduction tile, padded node count."""
    if n <= 256:
        n_pad = _round_up(n, 8)
        return n_pad, n_pad, n_pad          # single block along both node axes
    tm, tk = 256, 512                       # big row tiles; K-tiled for bounded VMEM
    return tm, tk, _round_up(n, tk)


# ---------------------------------------------------------------------------
# Pallas kernel 1: feature transform  XW = X @ W   (computed once per layer)
# ---------------------------------------------------------------------------
def _feature_transform_kernel(x_ref, w_ref, o_ref):
    o_ref[...] = jnp.dot(x_ref[...], w_ref[...],
                         preferred_element_type=jnp.float32).astype(o_ref.dtype)


def _feature_transform(x_p, w_p, *, tm, out_dtype):
    n_pad, f_in_pad = x_p.shape
    f_out_pad = w_p.shape[1]
    return pl.pallas_call(
        _feature_transform_kernel,
        out_shape=jax.ShapeDtypeStruct((n_pad, f_out_pad), out_dtype),
        grid=(pl.cdiv(n_pad, tm),),
        in_specs=[
            pl.BlockSpec((tm, f_in_pad), lambda i: (i, 0)),        # X row tile
            pl.BlockSpec((f_in_pad, f_out_pad), lambda i: (0, 0)), # full W (small)
        ],
        out_specs=pl.BlockSpec((tm, f_out_pad), lambda i: (i, 0)),
        compiler_params=pltpu.CompilerParams(dimension_semantics=("parallel",)),
    )(x_p, w_p)


# ---------------------------------------------------------------------------
# Pallas kernel 2: aggregation + fused epilogue
#   acc += A_hat[i, k] @ XW[k];  at last k:  post(acc + b)  with
#   post = relu / dropout / masked log_softmax depending on static flags.
# ---------------------------------------------------------------------------
def _gcn_agg_kernel(a_ref, xw_ref, b_ref, out_ref, acc_ref, *,
                    relu, log_softmax, dropout_p, training, seed, valid_cols):
    k = pl.program_id(1)

    @pl.when(k == 0)
    def _():
        acc_ref[...] = jnp.zeros_like(acc_ref)

    # MXU: (tm, tk) @ (tk, f_out_pad), f32 accumulation.
    acc_ref[...] += jnp.dot(a_ref[...], xw_ref[...],
                            preferred_element_type=jnp.float32)

    @pl.when(k == pl.num_programs(1) - 1)
    def _():
        h = acc_ref[...] + b_ref[...]                       # f32 epilogue

        if relu:
            h = jnp.maximum(h, 0.0)

        if training and dropout_p > 0.0:
            # F.dropout (inverted dropout): integer-threshold compare on raw uint32 bits,
            # scale folded into a single select.
            # TODO(synk): mask depends on the row-tile index (seed + program_id), so it is
            # a function of the tiling; thread a per-step key for reproducible training.
            pltpu.prng_seed(seed + pl.program_id(0))
            bits = pltpu.bitcast(pltpu.prng_random_bits(h.shape), jnp.uint32)
            thresh = jnp.uint32(min(int(round(dropout_p * (1 << 32))), (1 << 32) - 1))
            scale = jnp.float32(1.0 / (1.0 - dropout_p))
            h = jnp.where(bits >= thresh, h * scale, 0.0)

        if log_softmax:
            if valid_cols < h.shape[1]:
                # Mask zero-padded classes so they do not corrupt the normalizer.
                col = jax.lax.broadcasted_iota(jnp.int32, h.shape, 1)
                h = jnp.where(col < valid_cols, h, -jnp.inf)
            m = jnp.max(h, axis=1, keepdims=True)
            lse = m + jnp.log(jnp.sum(jnp.exp(h - m), axis=1, keepdims=True))
            h = h - lse

        out_ref[...] = h.astype(out_ref.dtype)


def _aggregate(a_p, xw_p, b_p, *, tm, tk, valid_cols,
               relu, log_softmax, dropout_p, training, seed):
    n_pad = a_p.shape[0]
    f_out_pad = xw_p.shape[1]
    kernel = functools.partial(
        _gcn_agg_kernel, relu=relu, log_softmax=log_softmax,
        dropout_p=dropout_p, training=training, seed=seed, valid_cols=valid_cols)
    return pl.pallas_call(
        kernel,
        out_shape=jax.ShapeDtypeStruct((n_pad, f_out_pad), jnp.float32),
        grid=(pl.cdiv(n_pad, tm), pl.cdiv(n_pad, tk)),
        in_specs=[
            pl.BlockSpec((tm, tk), lambda i, k: (i, k)),          # A_hat tile
            pl.BlockSpec((tk, f_out_pad), lambda i, k: (k, 0)),   # XW reduction slab
            pl.BlockSpec((1, f_out_pad), lambda i, k: (0, 0)),    # bias (tiny, invariant)
        ],
        out_specs=pl.BlockSpec((tm, f_out_pad), lambda i, k: (i, 0)),
        scratch_shapes=[pltpu.VMEM((tm, f_out_pad), jnp.float32)],
        compiler_params=pltpu.CompilerParams(
            dimension_semantics=("parallel", "arbitrary")),
    )(a_p, xw_p, b_p)


# ---------------------------------------------------------------------------
# One GCN layer = feature-transform kernel + aggregation kernel
# ---------------------------------------------------------------------------
def _gcn_layer(a_p, x, w, b, *, n_pad, tm, tk, mxu_dtype,
               relu, log_softmax, dropout_p, training, seed):
    f_in, f_out = w.shape
    f_in_pad = _round_up(max(x.shape[1], f_in), 128)
    f_out_pad = _round_up(f_out, 128)

    x_p = _pad2d(x, n_pad, f_in_pad).astype(mxu_dtype)
    w_p = _pad2d(w, f_in_pad, f_out_pad).astype(mxu_dtype)
    b_p = _pad2d(b.reshape(1, -1), 1, f_out_pad).astype(jnp.float32)

    xw = _feature_transform(x_p, w_p, tm=tm, out_dtype=mxu_dtype)
    return _aggregate(a_p, xw, b_p, tm=tm, tk=tk, valid_cols=f_out,
                      relu=relu, log_softmax=log_softmax,
                      dropout_p=dropout_p, training=training, seed=seed)


# ---------------------------------------------------------------------------
# Glue (plain JAX): GCN normalization, parameter init, full forward, reference.
# ---------------------------------------------------------------------------
def normalized_adjacency(edge_index, num_nodes):
    """A_hat = D^-1/2 (A + I) D^-1/2 (PyG GCNConv default normalization, densified)."""
    src, dst = edge_index
    a = jnp.zeros((num_nodes, num_nodes), jnp.float32).at[src, dst].add(1.0)
    a = jnp.minimum(a, 1.0)                        # de-duplicate edges (simple graphs)
    a = a + jnp.eye(num_nodes, dtype=jnp.float32)  # self loops
    deg = a.sum(axis=1)
    d_inv_sqrt = jnp.where(deg > 0, 1.0 / jnp.sqrt(deg), 0.0)
    return a * d_inv_sqrt[:, None] * d_inv_sqrt[None, :]


def glorot(key, fan_in, fan_out):
    limit = np.sqrt(6.0 / (fan_in + fan_out))
    return jax.random.uniform(key, (fan_in, fan_out), jnp.float32, -limit, limit)


def init_params(key, features, hidden, classes):
    k1, k2 = jax.random.split(key)
    return {
        "w1": glorot(k1, features, hidden),
        "b1": jnp.zeros((1, hidden), jnp.float32),
        "w2": glorot(k2, hidden, classes),
        "b2": jnp.zeros((1, classes), jnp.float32),
    }


def gcn_net_forward(params, x, a_hat, *, training=False, seed=0,
                    mxu_dtype=jnp.bfloat16):
    n = x.shape[0]
    classes = params["w2"].shape[1]

    tm, tk, n_pad = _choose_node_tiling(n)
    a_p = _pad2d(a_hat, n_pad, n_pad).astype(mxu_dtype)   # padded once, reused by both layers

    # conv1 -> relu -> dropout (dropout active only when training, as in F.dropout)
    h1 = _gcn_layer(a_p, x, params["w1"], params["b1"],
                    n_pad=n_pad, tm=tm, tk=tk, mxu_dtype=mxu_dtype,
                    relu=True, log_softmax=False,
                    dropout_p=0.5, training=training, seed=seed)
    # conv2 -> log_softmax(dim=1)
    out = _gcn_layer(a_p, h1, params["w2"], params["b2"],
                     n_pad=n_pad, tm=tm, tk=tk, mxu_dtype=mxu_dtype,
                     relu=False, log_softmax=True,
                     dropout_p=0.0, training=False, seed=seed)
    return out[:n, :classes]


def gcn_net_reference(params, x, a_hat):
    """Pure-JAX reference (eval mode) for correctness checking."""
    h = jnp.maximum(a_hat @ (x @ params["w1"]) + params["b1"], 0.0)
    z = a_hat @ (h @ params["w2"]) + params["b2"]
    return jax.nn.log_softmax(z, axis=1)


# ---------------------------------------------------------------------------
if __name__ == "__main__":
    N, FEATURES, HIDDEN, CLASSES = 16, 8, 32, 4

    key = jax.random.PRNGKey(0)
    k_x, k_p = jax.random.split(key)

    # Node features.
    x = jax.random.normal(k_x, (N, FEATURES), jnp.float32)

    # Deterministic small undirected graph: ring + chords, both directions.
    src_list, dst_list = [], []
    for i in range(N):
        for off in (1, 3):
            a, b = i, (i + off) % N
            src_list += [a, b]
            dst_list += [b, a]
    edge_index = jnp.array([src_list, dst_list], dtype=jnp.int32)  # (2, E)

    a_hat = normalized_adjacency(edge_index, N)
    params = init_params(k_p, FEATURES, HIDDEN, CLASSES)

    ref = jax.block_until_ready(gcn_net_reference(params, x, a_hat))

    # Strict check of the kernel math with f32 MXU operands.
    out_f32 = jax.block_until_ready(
        gcn_net_forward(params, x, a_hat, training=False, mxu_dtype=jnp.float32))
    assert out_f32.shape == (N, CLASSES)
    np.testing.assert_allclose(np.asarray(out_f32), np.asarray(ref),
                               rtol=1e-4, atol=1e-4)

    # Production config per perf review: bf16 MXU operands (halves A_hat HBM traffic),
    # f32 accumulation/epilogue — checked at bf16-appropriate tolerance.
    out_bf16 = jax.block_until_ready(
        gcn_net_forward(params, x, a_hat, training=False, mxu_dtype=jnp.bfloat16))
    assert out_bf16.shape == (N, CLASSES)
    np.testing.assert_allclose(np.asarray(out_bf16), np.asarray(ref),
                               rtol=5e-2, atol=5e-2)

    print("KERNEL_OK")
</pallas_src>

<mosaic_0001>
module attributes {stable_mosaic.version = 11 : i64} {
  func.func @_feature_transform_kernel(%arg0: i32, %arg1: memref<16x128xf32, #tpu.memory_space<vmem>>, %arg2: memref<128x128xf32, #tpu.memory_space<vmem>>, %arg3: memref<16x128xf32, #tpu.memory_space<vmem>>) attributes {dimension_semantics = [#tpu.dimension_semantics<parallel>], iteration_bounds = array<i64: 1>, scalar_prefetch = 0 : i64, scratch_operands = 0 : i64, tpu.core_type = #tpu.core_type<tc>, window_params = [{transform_indices = @transform_0, window_bounds = array<i64: 16, 128>}, {pipeline_mode = #tpu.pipeline_mode<synchronous>, transform_indices = @transform_1, window_bounds = array<i64: 128, 128>}, {transform_indices = @transform_2, window_bounds = array<i64: 16, 128>}]} {
    %c0 = arith.constant 0 : index
    %c0_0 = arith.constant 0 : index
    %0 = vector.load %arg1[%c0, %c0_0] : memref<16x128xf32, #tpu.memory_space<vmem>>, vector<16x128xf32>
    %c0_1 = arith.constant 0 : index
    %c0_2 = arith.constant 0 : index
    %1 = vector.load %arg2[%c0_1, %c0_2] : memref<128x128xf32, #tpu.memory_space<vmem>>, vector<128x128xf32>
    %cst = arith.constant dense<0.000000e+00> : vector<16x128xf32>
    %2 = tpu.matmul %0, %1, %cst {dimension_numbers = #tpu.dot_dimension_numbers<[1], [0], [0], [1], [0, 0, 1, 1], [], []>} : vector<16x128xf32>, vector<128x128xf32>, vector<16x128xf32> -> vector<16x128xf32>
    %c0_3 = arith.constant 0 : index
    %c0_4 = arith.constant 0 : index
    %3 = vector.load %arg3[%c0_3, %c0_4] : memref<16x128xf32, #tpu.memory_space<vmem>>, vector<16x128xf32>
    tpu.vector_store %arg3[%c0_3, %c0_4], %2 {strides = array<i32>} : memref<16x128xf32, #tpu.memory_space<vmem>>, vector<16x128xf32>,
    return
  }
  func.func @transform_0(%arg0: i32) -> (i32, i32) {
    %c0_i32 = arith.constant 0 : i32
    %c0_i32_0 = arith.constant 0 : i32
    return %arg0, %c0_i32 : i32, i32
  }
  func.func @transform_1(%arg0: i32) -> (i32, i32) {
    %c0_i32 = arith.constant 0 : i32
    %c0_i32_0 = arith.constant 0 : i32
    %c0_i32_1 = arith.constant 0 : i32
    return %c0_i32, %c0_i32_0 : i32, i32
  }
  func.func @transform_2(%arg0: i32) -> (i32, i32) {
    %c0_i32 = arith.constant 0 : i32
    %c0_i32_0 = arith.constant 0 : i32
    return %arg0, %c0_i32 : i32, i32
  }
}

</mosaic_0001>

<llo_original>
// kernel: tpu_custom_call.1
$region0: #{tpu_custom_call.1}
  #allocation0 [shape = 'u32[]', space=smem, size = 0x4, offset = 0x4, fixed_abs, tag = 'smem constant byte address 0x4 - core index']
  #allocation1 [shape = 'u32[144,128]{1,0:T(1,128)}', space=vmem, size = 0x12000, scoped, tag = 'internal scratch']
  %s0 = inlined_call_operand.hbm [shape: f32[16,128], index: 0, kind: input, shape index: {}]
  %s1 = inlined_call_operand.hbm [shape: f32[128,128], index: 1, kind: input, shape index: {}]
  %s2 = inlined_call_operand.hbm [shape: f32[16,128], index: 2, kind: output, shape index: {}]
  %s3 = sld [smem:[#allocation0]]
  $region26: #{tpu_custom_call.1} parent=0
    _
  %s5 = ssub.s32 1, %s3
  %s6 = scalar_select 0, %s5, %s3
  $region1: #{tpu_custom_call.1} parent=0
    #allocation2 [shape = 'u8[8192]{0}', space=vmem, size = 0x2000, scoped, tag = 'input window, operand 0, single buffered']
    #allocation3 [shape = 's32[1]{0}', space=sflag, size = 0x4, scoped, tag = 'scoped memory for tpu_custom_call.1']
    #allocation4 [shape = 's32[1]{0}', space=sflag, size = 0x4, scoped, tag = 'scoped memory for tpu_custom_call.1']
    #allocation5 [shape = 'u8[65536]{0}', space=vmem, size = 0x10000, scoped, tag = 'input window, operand 1, single buffered']
    #allocation6 [shape = 's32[1]{0}', space=sflag, size = 0x4, scoped, tag = 'scoped memory for tpu_custom_call.1']
    #allocation7 [shape = 'u8[8192]{0}', space=vmem, size = 0x2000, scoped, tag = 'output window, operand 0, single buffered']
    %7 = vsyncpa [#allocation3], 0
    %8 = vsyncpa [#allocation6], 0
    %9 = vsyncpa [#allocation4], 0
    // Predicated region
    $region2: #{tpu_custom_call.1} parent=1 // pred_check
      _
    $region3: #{tpu_custom_call.1} parent=1 // pred_check_branch
      %11 = sbr.rel (0) target = $region5
    $region4: #{tpu_custom_call.1} parent=1 // pred_region
      %s13 = ssub.s32 256, 256
      %14 = vsyncadd [#allocation3], %s13
      %s15 = sshll.u32 [#allocation2], 4
      %s16 = int_to_ptr.vmem [resolvable:$true] %s15
      %21 = dma.hbm_to_vmem [thread:$0]  %s0, 256, %s16, [#allocation3], 128, 128, 8
    $region5: #{tpu_custom_call.1} parent=1 // pred_fallthru
      _
    // Predicated region
    $region6: #{tpu_custom_call.1} parent=1 // pred_check
      _
    $region7: #{tpu_custom_call.1} parent=1 // pred_check_branch
      %23 = sbr.rel (0) target = $region9
    $region8: #{tpu_custom_call.1} parent=1 // pred_region
      %s25 = ssub.s32 2048, 2048
      %26 = vsyncadd [#allocation6], %s25
      %s27 = sshll.u32 [#allocation5], 4
      %s28 = int_to_ptr.vmem [resolvable:$true] %s27
      %33 = dma.hbm_to_vmem [thread:$0]  %s1, 2048, %s28, [#allocation6], 128, 128, 8
    $region9: #{tpu_custom_call.1} parent=1 // pred_fallthru
      _
    // Predicated region
    $region10: #{tpu_custom_call.1} parent=1 // pred_check
      _
    $region11: #{tpu_custom_call.1} parent=1 // pred_check_branch
      %35 = sbr.rel (0) target = $region13
    $region12: #{tpu_custom_call.1} parent=1 // pred_region
      %36 = dma.done [#allocation3], 256
    $region13: #{tpu_custom_call.1} parent=1 // pred_fallthru
      _
    // Predicated region
    $region14: #{tpu_custom_call.1} parent=1 // pred_check
      _
    $region15: #{tpu_custom_call.1} parent=1 // pred_check_branch
      %38 = sbr.rel (0) target = $region17
    $region16: #{tpu_custom_call.1} parent=1 // pred_region
      %39 = dma.done [#allocation6], 2048
    $region17: #{tpu_custom_call.1} parent=1 // pred_fallthru
      _
    %v40 = vld [vmem:[#allocation2] sm:$0xff]
    %v41 = vld [vmem:[#allocation2 + $0x8] sm:$0xff]
    %v42 = vld [vmem:[#allocation5] sm:$0xff]
    %v43 = vld [vmem:[#allocation5 + $0x8] sm:$0xff]
    %v44 = vld [vmem:[#allocation5 + $0x10] sm:$0xff]
    %v45 = vld [vmem:[#allocation5 + $0x18] sm:$0xff]
    %v46 = vld [vmem:[#allocation5 + $0x20] sm:$0xff]
    %v47 = vld [vmem:[#allocation5 + $0x28] sm:$0xff]
    %v48 = vld [vmem:[#allocation5 + $0x30] sm:$0xff]
    %v49 = vld [vmem:[#allocation5 + $0x38] sm:$0xff]
    %v50 = vld [vmem:[#allocation5 + $0x40] sm:$0xff]
    %v51 = vld [vmem:[#allocation5 + $0x48] sm:$0xff]
    %v52 = vld [vmem:[#allocation5 + $0x50] sm:$0xff]
    %v53 = vld [vmem:[#allocation5 + $0x58] sm:$0xff]
    %v54 = vld [vmem:[#allocation5 + $0x60] sm:$0xff]
    %v55 = vld [vmem:[#allocation5 + $0x68] sm:$0xff]
    %v56 = vld [vmem:[#allocation5 + $0x70] sm:$0xff]
    %v57 = vld [vmem:[#allocation5 + $0x78] sm:$0xff]
    %58 = vmatprep.subr.mxu0 0.0
    %59 = vmatpush1.msra.mxu0 %v42
    %60 = vmatprep.subr.mxu0 0.0
    %61 = vmatpush1.msra.mxu0 %v43
    %62 = vmatprep.subr.mxu0 0.0
    %63 = vmatpush1.msra.mxu0 %v44
    %64 = vmatprep.subr.mxu0 0.0
    %65 = vmatpush1.msra.mxu0 %v45
    %66 = vmatprep.subr.mxu0 0.0
    %67 = vmatpush1.msra.mxu0 %v46
    %68 = vmatprep.subr.mxu0 0.0
    %69 = vmatpush1.msra.mxu0 %v47
    %70 = vmatprep.subr.mxu0 0.0
    %71 = vmatpush1.msra.mxu0 %v48
    %72 = vmatprep.subr.mxu0 0.0
    %73 = vmatpush1.msra.mxu0 %v49
    %74 = vmatprep.subr.mxu0 0.0
    %75 = vmatpush1.msra.mxu0 %v50
    %76 = vmatprep.subr.mxu0 0.0
    %77 = vmatpush1.msra.mxu0 %v51
    %78 = vmatprep.subr.mxu0 0.0
    %79 = vmatpush1.msra.mxu0 %v52
    %80 = vmatprep.subr.mxu0 0.0
    %81 = vmatpush1.msra.mxu0 %v53
    %82 = vmatprep.subr.mxu0 0.0
    %83 = vmatpush1.msra.mxu0 %v54
    %84 = vmatprep.subr.mxu0 0.0
    %85 = vmatpush1.msra.mxu0 %v55
    %86 = vmatprep.subr.mxu0 0.0
    %87 = vmatpush1.msra.mxu0 %v56
    %88 = vmatprep.subr.mxu0 0.0
    %89 = vmatpush1.msra.mxu0 %v57
    %90 = vmatprep.subr.mxu0 0.0
    %91 = vmatpush1.msra.mxu0 0.0
    %92 = vmatprep.subr.mxu0 0.0
    %93 = vmatpush1.msra.mxu0 0.0
    %94 = vmatprep.subr.mxu0 0.0
    %95 = vmatpush1.msra.mxu0 0.0
    %96 = vmatprep.subr.mxu0 0.0
    %97 = vmatpush1.msra.mxu0 0.0
    %98 = vmatprep.subr.mxu0 0.0
    %99 = vmatpush1.msra.mxu0 0.0
    %100 = vmatprep.subr.mxu0 0.0
    %101 = vmatpush1.msra.mxu0 0.0
    %102 = vmatprep.subr.mxu0 0.0
    %103 = vmatpush1.msra.mxu0 0.0
    %104 = vmatprep.subr.mxu0 0.0
    %105 = vmatpush1.msra.mxu0 0.0
    %106 = vmatprep.subr.mxu0 0.0
    %107 = vmatpush1.msra.mxu0 0.0
    %108 = vmatprep.subr.mxu0 0.0
    %109 = vmatpush1.msra.mxu0 0.0
    %110 = vmatprep.subr.mxu0 0.0
    %111 = vmatpush1.msra.mxu0 0.0
    %112 = vmatprep.subr.mxu0 0.0
    %113 = vmatpush1.msra.mxu0 0.0
    %114 = vmatprep.subr.mxu0 0.0
    %115 = vmatpush1.msra.mxu0 0.0
    %116 = vmatprep.subr.mxu0 0.0
    %117 = vmatpush1.msra.mxu0 0.0
    %118 = vmatprep.subr.mxu0 0.0
    %119 = vmatpush1.msra.mxu0 0.0
    %120 = vmatprep.subr.mxu0 0.0
    %121 = vmatpush1.msra.mxu0 0.0
    %122 = vmatprep.mubr.f32.mxu0 0.0
    %123 = vmatmul.mubr.f32.gmra.mrb[0].mxu0 %v40
    %v124 = vpop.f32.mrb[0].mxu0
    %v125 = vadd.f32 0.0, %v124
    %v126 = vpop.f32.mrb[0].mxu0
    %127 = vmatprep.mubr.f32.mxu0 0.0
    %128 = vmatmul.mubr.f32.gmra.mrb[0].mxu0 %v41
    %v129 = vpop.f32.mrb[0].mxu0
    %v130 = vadd.f32 0.0, %v129
    %v131 = vpop.f32.mrb[0].mxu0
    %132 = vdwg.mxu0
    %133 = vst [vmem:[#allocation7] sm:$0xff] %v125
    %134 = vst [vmem:[#allocation7 + $0x8] sm:$0xff] %v130
    // Predicated region
    $region18: #{tpu_custom_call.1} parent=1 // pred_check
      _
    $region19: #{tpu_custom_call.1} parent=1 // pred_check_branch
      %136 = sbr.rel (0) target = $region21
    $region20: #{tpu_custom_call.1} parent=1 // pred_region
      %s138 = ssub.s32 256, 256
      %139 = vsyncadd [#allocation4], %s138
      %s140 = sshll.u32 [#allocation7], 4
      %s141 = int_to_ptr.vmem [resolvable:$true] %s140
      %146 = dma.vmem_to_hbm [thread:$0]  %s141, 256, %s2, [#allocation4], 128, 128, 8
    $region21: #{tpu_custom_call.1} parent=1 // pred_fallthru
      _
    // Predicated region
    $region22: #{tpu_custom_call.1} parent=1 // pred_check
      _
    $region23: #{tpu_custom_call.1} parent=1 // pred_check_branch
      %148 = sbr.rel (0) target = $region25
    $region24: #{tpu_custom_call.1} parent=1 // pred_region
      %149 = dma.done [#allocation4], 256
    $region25: #{tpu_custom_call.1} parent=1 // pred_fallthru
      _
    %150 = vsyncpa [#allocation3], 1
    %151 = vsyncpa [#allocation6], 1
    %152 = vsyncpa [#allocation4], 1

</llo_original>
